<compile_context>
chip_gen: v6e
topology: v6e:2x2x1
jax: 0.10.0
libtpu: 0.0.40
codegen_flags: <defaults>
</compile_context>

<pallas_src>
import functools

import jax
import jax.numpy as jnp
import numpy as np
from jax.experimental import pallas as pl
from jax.experimental.pallas import tpu as pltpu


def _round_up(a: int, m: int) -> int:
    return (a + m - 1) // m * m


def _vmem_capacity_bytes() -> int:
    """Physical VMEM per TensorCore; conservative (v7x = 64 MiB) if unknown."""
    try:
        info = pltpu.get_tpu_info()
        cap = int(getattr(info, "vmem_capacity_bytes", 0) or 0)
        if cap > 0:
            return cap
    except Exception:
        pass
    return 64 * 1024 * 1024


def _gap_kernel_f32(off_ref, len_ref, inv_ref, x_ref, o_ref):
    # f32 path: accumulate directly into the k-resident output slab (no scratch).
    k = pl.program_id(1)
    tn = x_ref.shape[0]

    @pl.when(k == 0)
    def _init():
        o_ref[...] = jnp.zeros_like(o_ref)

    # 1-row iota; broadcasting against the [B_pad, 1] offset/length columns keeps
    # the VPU cost of the mask build O(tn) + compare, not an extra [B_pad, tn] add.
    col = k * tn + jax.lax.broadcasted_iota(jnp.int32, (1, tn), 1)
    off = off_ref[...]                                   # [B_pad, 1]
    ln = len_ref[...]                                    # [B_pad, 1]
    w = ((col >= off) & (col < off + ln)).astype(x_ref.dtype)   # [B_pad, tn]

    o_ref[...] += jnp.dot(
        w, x_ref[...],
        preferred_element_type=jnp.float32,
        precision=jax.lax.Precision.DEFAULT,
    )

    @pl.when(k == pl.num_programs(1) - 1)
    def _finalize():
        o_ref[...] = o_ref[...] * inv_ref[...]


def _gap_kernel_acc(off_ref, len_ref, inv_ref, x_ref, o_ref, acc_ref):
    # Generic path (e.g. bf16 output): f32 accumulator scratch, cast once at the end.
    k = pl.program_id(1)
    tn = x_ref.shape[0]

    @pl.when(k == 0)
    def _init():
        acc_ref[...] = jnp.zeros_like(acc_ref)

    col = k * tn + jax.lax.broadcasted_iota(jnp.int32, (1, tn), 1)
    off = off_ref[...]
    ln = len_ref[...]
    w = ((col >= off) & (col < off + ln)).astype(x_ref.dtype)

    acc_ref[...] += jnp.dot(
        w, x_ref[...],
        preferred_element_type=jnp.float32,
        precision=jax.lax.Precision.DEFAULT,
    )

    @pl.when(k == pl.num_programs(1) - 1)
    def _finalize():
        o_ref[...] = (acc_ref[...] * inv_ref[...]).astype(o_ref.dtype)


@jax.jit
def global_average_block(x, lengths):
    """
    x:        [N, D] float array of concatenated per-point features
    lengths:  [B]    int array, number of rows belonging to each batch element
    returns:  [B, D] per-batch-element mean features (same dtype as x)
    """
    x = jnp.asarray(x)
    lengths = jnp.asarray(lengths, dtype=jnp.int32)
    n, d = x.shape
    b = lengths.shape[0]

    itemsize = jnp.dtype(x.dtype).itemsize
    sub = {4: 8, 2: 16, 1: 32}.get(itemsize, 8)          # dtype-native sublane packing

    # ---- Column-tile (lane) geometry: widest multiple-of-128 strip (<=1024) that
    # divides the 128-padded D, preferring >= 2 D tiles when D >= 256 so v7x's two
    # TensorCores can each take a parallel D tile. ----
    d_128 = _round_up(max(d, 1), 128)
    units = d_128 // 128
    td_units = 1
    for kdiv in range(1, units + 1):
        if units % kdiv == 0 and 128 * kdiv <= 1024 and (units // kdiv >= 2 or units == 1):
            td_units = kdiv
    td = 128 * td_units
    d_pad = d_128

    # ---- Row-tile (sublane) geometry from a byte budget so the per-grid-step
    # overhead amortizes against the x-tile DMA. Generation-aware: v7x (64 MiB VMEM)
    # gets 8 MiB/buffer, v5e/v6e (128 MiB) get 16 MiB/buffer. ----
    vmem_cap = _vmem_capacity_bytes()
    x_buf_budget = 8 * 1024 * 1024 if vmem_cap <= 64 * 1024 * 1024 else 16 * 1024 * 1024
    tn = x_buf_budget // (td * itemsize)
    tn = min(tn, 32768, _round_up(max(n, 1), sub))
    tn = max(_round_up(tn, sub), sub)
    n_pad = _round_up(max(n, 1), tn)

    b_pad = _round_up(max(b, 1), sub)

    # Zero-pad x; padded rows/cols contribute exact zeros to the result.
    if (n_pad, d_pad) != (n, d):
        x_p = jnp.zeros((n_pad, d_pad), x.dtype).at[:n, :d].set(x)
    else:
        x_p = x

    # Exclusive prefix sum -> starting row offset of each segment.
    offsets = jnp.concatenate(
        [jnp.zeros((1,), jnp.int32), jnp.cumsum(lengths)[:-1].astype(jnp.int32)]
    )
    lengths_p = jnp.zeros((b_pad,), jnp.int32).at[:b].set(lengths)
    offsets_p = jnp.zeros((b_pad,), jnp.int32).at[:b].set(offsets)
    # Guarded reciprocal: empty (or padded) segments yield 0 instead of inf/NaN.
    # TODO(synk): PyTorch mean of an empty slice would give NaN; we return 0 instead.
    inv_len = jnp.where(
        lengths_p > 0, 1.0 / jnp.maximum(lengths_p, 1).astype(jnp.float32), 0.0
    )

    off2 = offsets_p.reshape(b_pad, 1)
    len2 = lengths_p.reshape(b_pad, 1)
    inv2 = inv_len.reshape(b_pad, 1).astype(jnp.float32)

    out_is_f32 = x.dtype == jnp.float32
    kernel = _gap_kernel_f32 if out_is_f32 else _gap_kernel_acc
    scratch_shapes = [] if out_is_f32 else [pltpu.VMEM((b_pad, td), jnp.float32)]

    # VMEM footprint (x double-buffered, output slab double-buffered, optional acc),
    # capped to leave headroom on v7x's 64 MiB physical VMEM.
    footprint = (
        2 * tn * td * itemsize
        + 2 * b_pad * td * itemsize
        + (0 if out_is_f32 else b_pad * td * 4)
        + 6 * b_pad * 4
    )
    vmem_limit = min(
        max(footprint + 8 * 1024 * 1024, 32 * 1024 * 1024),
        max(vmem_cap - 16 * 1024 * 1024, 32 * 1024 * 1024),
    )

    grid = (d_pad // td, n_pad // tn)

    grid_spec = pltpu.PrefetchScalarGridSpec(
        num_scalar_prefetch=0,
        grid=grid,
        in_specs=[
            pl.BlockSpec((b_pad, 1), lambda j, k: (0, 0)),      # offsets
            pl.BlockSpec((b_pad, 1), lambda j, k: (0, 0)),      # lengths
            pl.BlockSpec((b_pad, 1), lambda j, k: (0, 0)),      # 1/length
            pl.BlockSpec((tn, td), lambda j, k: (k, j)),        # x row/col tile
        ],
        out_specs=pl.BlockSpec((b_pad, td), lambda j, k: (0, j)),
        scratch_shapes=scratch_shapes,
    )

    out_p = pl.pallas_call(
        kernel,
        out_shape=jax.ShapeDtypeStruct((b_pad, d_pad), x.dtype),
        grid_spec=grid_spec,
        compiler_params=pltpu.CompilerParams(
            dimension_semantics=("parallel", "arbitrary"),
            vmem_limit_bytes=int(vmem_limit),
        ),
    )(off2, len2, inv2, x_p)

    return out_p[:b, :d]


def _reference(x, lengths):
    # Plain-numpy reference mirroring the PyTorch loop.
    outs = []
    i0 = 0
    x = np.asarray(x)
    for length in np.asarray(lengths):
        outs.append(x[i0:i0 + int(length)].mean(axis=0))
        i0 += int(length)
    return np.stack(outs)


if __name__ == "__main__":
    key = jax.random.PRNGKey(0)
    N, D, B = 16, 128, 3
    lengths = jnp.array([5, 7, 4], dtype=jnp.int32)   # sums to N
    x = jax.random.normal(key, (N, D), dtype=jnp.float32)

    out = global_average_block(x, lengths)
    out = jax.block_until_ready(out)

    ref = _reference(x, lengths)
    # DEFAULT MXU precision runs the f32 dot as a single bf16 pass (perf choice per
    # review); tolerance reflects the ~2^-9 mantissa truncation of x.
    np.testing.assert_allclose(np.asarray(out), ref, rtol=5e-3, atol=5e-3)
    print("KERNEL_OK")
</pallas_src>

<mosaic_0001>
module attributes {stable_mosaic.version = 11 : i64} {
  func.func @_gap_kernel_f32(%arg0: i32, %arg1: i32, %arg2: memref<8x1xi32, #tpu.memory_space<vmem>>, %arg3: memref<8x1xi32, #tpu.memory_space<vmem>>, %arg4: memref<8x1xf32, #tpu.memory_space<vmem>>, %arg5: memref<16x128xf32, #tpu.memory_space<vmem>>, %arg6: memref<8x128xf32, #tpu.memory_space<vmem>>) attributes {dimension_semantics = [#tpu.dimension_semantics<parallel>, #tpu.dimension_semantics<arbitrary>], iteration_bounds = array<i64: 1, 1>, scalar_prefetch = 0 : i64, scratch_operands = 0 : i64, tpu.core_type = #tpu.core_type<tc>, window_params = [{pipeline_mode = #tpu.pipeline_mode<synchronous>, transform_indices = @transform_0, window_bounds = array<i64: 8, 1>}, {pipeline_mode = #tpu.pipeline_mode<synchronous>, transform_indices = @transform_1, window_bounds = array<i64: 8, 1>}, {pipeline_mode = #tpu.pipeline_mode<synchronous>, transform_indices = @transform_2, window_bounds = array<i64: 8, 1>}, {transform_indices = @transform_3, window_bounds = array<i64: 16, 128>}, {transform_indices = @transform_4, window_bounds = array<i64: 8, 128>}]} {
    %c0_i32 = arith.constant 0 : i32
    %0 = arith.cmpi eq, %arg1, %c0_i32 : i32
    %1 = arith.extui %0 : i1 to i32
    %c0_i32_0 = arith.constant 0 : i32
    %2 = arith.cmpi ne, %1, %c0_i32_0 : i32
    scf.if %2 {
      %cst_12 = arith.constant 0.000000e+00 : f32
      %27 = vector.broadcast %cst_12 : f32 to vector<8x128xf32>
      %c0_13 = arith.constant 0 : index
      %c0_14 = arith.constant 0 : index
      %28 = vector.load %arg6[%c0_13, %c0_14] : memref<8x128xf32, #tpu.memory_space<vmem>>, vector<8x128xf32>
      tpu.vector_store %arg6[%c0_13, %c0_14], %27 {strides = array<i32>} : memref<8x128xf32, #tpu.memory_space<vmem>>, vector<8x128xf32>,
    } else {
    }
    %c16_i32 = arith.constant 16 : i32
    %3 = arith.muli %arg1, %c16_i32 : i32
    %4 = tpu.iota {dimensions = array<i32: 1>} : vector<1x16xi32>
    %5 = vector.broadcast %3 : i32 to vector<1x16xi32>
    %6 = arith.addi %5, %4 : vector<1x16xi32>
    %c0 = arith.constant 0 : index
    %c0_1 = arith.constant 0 : index
    %7 = vector.load %arg2[%c0, %c0_1] : memref<8x1xi32, #tpu.memory_space<vmem>>, vector<8x1xi32>
    %c0_2 = arith.constant 0 : index
    %c0_3 = arith.constant 0 : index
    %8 = vector.load %arg3[%c0_2, %c0_3] : memref<8x1xi32, #tpu.memory_space<vmem>>, vector<8x1xi32>
    %9 = vector.broadcast %6 : vector<1x16xi32> to vector<8x16xi32>
    %10 = vector.broadcast %7 : vector<8x1xi32> to vector<8x16xi32>
    %11 = arith.cmpi sge, %9, %10 : vector<8x16xi32>
    %12 = arith.addi %7, %8 : vector<8x1xi32>
    %13 = vector.broadcast %6 : vector<1x16xi32> to vector<8x16xi32>
    %14 = vector.broadcast %12 : vector<8x1xi32> to vector<8x16xi32>
    %15 = arith.cmpi slt, %13, %14 : vector<8x16xi32>
    %16 = arith.andi %11, %15 : vector<8x16xi1>
    %17 = arith.extui %16 : vector<8x16xi1> to vector<8x16xi32>
    %18 = arith.sitofp %17 : vector<8x16xi32> to vector<8x16xf32>
    %c0_4 = arith.constant 0 : index
    %c0_5 = arith.constant 0 : index
    %19 = vector.load %arg6[%c0_4, %c0_5] : memref<8x128xf32, #tpu.memory_space<vmem>>, vector<8x128xf32>
    %c0_6 = arith.constant 0 : index
    %c0_7 = arith.constant 0 : index
    %20 = vector.load %arg5[%c0_6, %c0_7] : memref<16x128xf32, #tpu.memory_space<vmem>>, vector<16x128xf32>
    %cst = arith.constant dense<0.000000e+00> : vector<8x128xf32>
    %21 = tpu.matmul %18, %20, %cst {dimension_numbers = #tpu.dot_dimension_numbers<[1], [0], [0], [1], [0, 0, 1, 1], [], []>} : vector<8x16xf32>, vector<16x128xf32>, vector<8x128xf32> -> vector<8x128xf32>
    %22 = arith.addf %19, %21 : vector<8x128xf32>
    %c0_8 = arith.constant 0 : index
    %c0_9 = arith.constant 0 : index
    %23 = vector.load %arg6[%c0_8, %c0_9] : memref<8x128xf32, #tpu.memory_space<vmem>>, vector<8x128xf32>
    tpu.vector_store %arg6[%c0_8, %c0_9], %22 {strides = array<i32>} : memref<8x128xf32, #tpu.memory_space<vmem>>, vector<8x128xf32>,
    %c0_i32_10 = arith.constant 0 : i32
    %24 = arith.cmpi eq, %arg1, %c0_i32_10 : i32
    %25 = arith.extui %24 : i1 to i32
    %c0_i32_11 = arith.constant 0 : i32
    %26 = arith.cmpi ne, %25, %c0_i32_11 : i32
    scf.if %26 {
      %c0_12 = arith.constant 0 : index
      %c0_13 = arith.constant 0 : index
      %27 = vector.load %arg6[%c0_12, %c0_13] : memref<8x128xf32, #tpu.memory_space<vmem>>, vector<8x128xf32>
      %c0_14 = arith.constant 0 : index
      %c0_15 = arith.constant 0 : index
      %28 = vector.load %arg4[%c0_14, %c0_15] : memref<8x1xf32, #tpu.memory_space<vmem>>, vector<8x1xf32>
      %29 = vector.broadcast %28 : vector<8x1xf32> to vector<8x128xf32>
      %30 = arith.mulf %27, %29 : vector<8x128xf32>
      %c0_16 = arith.constant 0 : index
      %c0_17 = arith.constant 0 : index
      %31 = vector.load %arg6[%c0_16, %c0_17] : memref<8x128xf32, #tpu.memory_space<vmem>>, vector<8x128xf32>
      tpu.vector_store %arg6[%c0_16, %c0_17], %30 {strides = array<i32>} : memref<8x128xf32, #tpu.memory_space<vmem>>, vector<8x128xf32>,
    } else {
    }
    return
  }
  func.func @transform_0(%arg0: i32, %arg1: i32) -> (i32, i32) {
    %c0_i32 = arith.constant 0 : i32
    %c0_i32_0 = arith.constant 0 : i32
    %c0_i32_1 = arith.constant 0 : i32
    return %c0_i32, %c0_i32_0 : i32, i32
  }
  func.func @transform_1(%arg0: i32, %arg1: i32) -> (i32, i32) {
    %c0_i32 = arith.constant 0 : i32
    %c0_i32_0 = arith.constant 0 : i32
    %c0_i32_1 = arith.constant 0 : i32
    return %c0_i32, %c0_i32_0 : i32, i32
  }
  func.func @transform_2(%arg0: i32, %arg1: i32) -> (i32, i32) {
    %c0_i32 = arith.constant 0 : i32
    %c0_i32_0 = arith.constant 0 : i32
    %c0_i32_1 = arith.constant 0 : i32
    return %c0_i32, %c0_i32_0 : i32, i32
  }
  func.func @transform_3(%arg0: i32, %arg1: i32) -> (i32, i32) {
    %c0_i32 = arith.constant 0 : i32
    return %arg1, %arg0 : i32, i32
  }
  func.func @transform_4(%arg0: i32, %arg1: i32) -> (i32, i32) {
    %c0_i32 = arith.constant 0 : i32
    %c0_i32_0 = arith.constant 0 : i32
    return %c0_i32, %arg0 : i32, i32
  }
}

</mosaic_0001>

<llo_original>
// kernel: global_average_block.1
$region0: #{global_average_block.1}
  #allocation0 [shape = 'u32[]', space=smem, size = 0x4, offset = 0x4, fixed_abs, tag = 'smem constant byte address 0x4 - core index']
  #allocation1 [shape = 'u32[144,128]{1,0:T(1,128)}', space=vmem, size = 0x12000, scoped, tag = 'internal scratch']
  %s0 = inlined_call_operand.vmem [shape: s32[8,1], index: 0, kind: input, shape index: {}]
  %s1 = inlined_call_operand.vmem [shape: s32[8,1], index: 1, kind: input, shape index: {}]
  %s2 = inlined_call_operand.vmem [shape: f32[8,1], index: 2, kind: input, shape index: {}]
  %s3 = inlined_call_operand.vmem [shape: f32[16,128], index: 3, kind: input, shape index: {}]
  %s4 = inlined_call_operand.vmem [shape: f32[8,128], index: 4, kind: output, shape index: {}]
  %s5 = sld [smem:[#allocation0]]
  $region34: #{global_average_block.1} parent=0
    _
  %s7 = ssub.s32 1, %s5
  %s8 = scalar_select 0, %s7, %s5
  // Predicated region
  $region2: #{global_average_block.1} parent=0 // pred_check
    _
  $region3: #{global_average_block.1} parent=0 // pred_check_branch
    %10 = sbr.rel (0) target = $region5
  $region4: #{global_average_block.1} parent=0 // pred_region
    _
  $region5: #{global_average_block.1} parent=0 // pred_fallthru
    _
  // Predicated region
  $region6: #{global_average_block.1} parent=0 // pred_check
    _
  $region7: #{global_average_block.1} parent=0 // pred_check_branch
    %12 = sbr.rel (0) target = $region9
  $region8: #{global_average_block.1} parent=0 // pred_region
    _
  $region9: #{global_average_block.1} parent=0 // pred_fallthru
    _
  // Predicated region
  $region10: #{global_average_block.1} parent=0 // pred_check
    _
  $region11: #{global_average_block.1} parent=0 // pred_check_branch
    %14 = sbr.rel (0) target = $region13
  $region12: #{global_average_block.1} parent=0 // pred_region
    _
  $region13: #{global_average_block.1} parent=0 // pred_fallthru
    _
  // Predicated region
  $region14: #{global_average_block.1} parent=0 // pred_check
    _
  $region15: #{global_average_block.1} parent=0 // pred_check_branch
    %16 = sbr.rel (0) target = $region17
  $region16: #{global_average_block.1} parent=0 // pred_region
    _
  $region17: #{global_average_block.1} parent=0 // pred_fallthru
    _
  %p17 = scmp.eq.s32.totalorder 0, 0
  // Predicated region
  $region18: #{global_average_block.1} parent=0 // pred_check
    %p18 = pneg %p17
  $region19: #{global_average_block.1} parent=0 // pred_check_branch
    %20 = sbr.rel (%p18) target = $region21
  $region20: #{global_average_block.1} parent=0 // pred_region
    %21 = vst [vmem:[%s4] sm:$0xff] 0.0
  $region21: #{global_average_block.1} parent=0 // pred_fallthru
    _
  %s22 = smul.u32 0, 16
  %v23 = vlaneseq
  %v24 = vand.u32 %v23, 127
  %v25 = vstv %s22
  %v26 = vadd.s32 %v25, %v24
  %v27 = vld [vmem:[%s0] sm:$0xff]
  %v28 = vld [vmem:[%s1] sm:$0xff]
  %29 = vset.pattern.permute.xlu0 0
  %30 = vperm.xlu0 %29, %v27
  %v31 = vpop.permute.xlu0 %30
  %vm32 = vcmp.ge.s32.totalorder %v26, %v31
  %v33 = vadd.s32 %v27, %v28
  %34 = vset.pattern.permute.xlu0 0
  %35 = vperm.xlu0 %34, %v33
  %v36 = vpop.permute.xlu0 %35
  %vm37 = vcmp.lt.s32.totalorder %v26, %v36
  %vm38 = vmand %vm32, %vm37
  %v39 = vsel %vm38, 1, 0
  %v40 = vcvt.s32.f32 %v39
  %v41 = vld [vmem:[%s4] sm:$0xff]
  %v42 = vld [vmem:[%s3] sm:$0xff]
  %v43 = vld [vmem:[%s3 + $0x8] sm:$0xff]
  %vm44 = vcmask 130048
  %v46 = vsel %vm44, %v40, 0
  %48 = vmatprep.subr.mxu0 0.0
  %49 = vmatpush1.msra.mxu0 0.0
  %50 = vmatprep.subr.mxu0 0.0
  %51 = vmatpush1.msra.mxu0 0.0
  %52 = vmatprep.subr.mxu0 0.0
  %53 = vmatpush1.msra.mxu0 0.0
  %54 = vmatprep.subr.mxu0 0.0
  %55 = vmatpush1.msra.mxu0 0.0
  %56 = vmatprep.subr.mxu0 0.0
  %57 = vmatpush1.msra.mxu0 0.0
  %58 = vmatprep.subr.mxu0 0.0
  %59 = vmatpush1.msra.mxu0 0.0
  %60 = vmatprep.subr.mxu0 0.0
  %61 = vmatpush1.msra.mxu0 0.0
  %62 = vmatprep.subr.mxu0 0.0
  %63 = vmatpush1.msra.mxu0 0.0
  %64 = vmatprep.subr.mxu0 0.0
  %65 = vmatpush1.msra.mxu0 0.0
  %66 = vmatprep.subr.mxu0 0.0
  %67 = vmatpush1.msra.mxu0 0.0
  %68 = vmatprep.subr.mxu0 0.0
  %69 = vmatpush1.msra.mxu0 0.0
  %70 = vmatprep.subr.mxu0 0.0
  %71 = vmatpush1.msra.mxu0 0.0
  %72 = vmatprep.subr.mxu0 0.0
  %73 = vmatpush1.msra.mxu0 0.0
  %74 = vmatprep.subr.mxu0 0.0
  %75 = vmatpush1.msra.mxu0 0.0
  %76 = vmatprep.subr.mxu0 0.0
  %77 = vmatpush1.msra.mxu0 %v43
  %78 = vmatprep.subr.mxu0 0.0
  %79 = vmatpush1.msra.mxu0 %v42
  %80 = vmatprep.subr.mxu0 0.0
  %81 = vmatpush2.msra.mxu0 0.0
  %82 = vmatprep.subr.mxu0 0.0
  %83 = vmatpush2.msra.mxu0 0.0
  %84 = vmatprep.subr.mxu0 0.0
  %85 = vmatpush2.msra.mxu0 0.0
  %86 = vmatprep.subr.mxu0 0.0
  %87 = vmatpush2.msra.mxu0 0.0
  %88 = vmatprep.subr.mxu0 0.0
  %89 = vmatpush2.msra.mxu0 0.0
  %90 = vmatprep.subr.mxu0 0.0
  %91 = vmatpush2.msra.mxu0 0.0
  %92 = vmatprep.subr.mxu0 0.0
  %93 = vmatpush2.msra.mxu0 0.0
  %94 = vmatprep.subr.mxu0 0.0
  %95 = vmatpush2.msra.mxu0 0.0
  %96 = vmatprep.subr.mxu0 0.0
  %97 = vmatpush2.msra.mxu0 0.0
  %98 = vmatprep.subr.mxu0 0.0
  %99 = vmatpush2.msra.mxu0 0.0
  %100 = vmatprep.subr.mxu0 0.0
  %101 = vmatpush2.msra.mxu0 0.0
  %102 = vmatprep.subr.mxu0 0.0
  %103 = vmatpush2.msra.mxu0 0.0
  %104 = vmatprep.subr.mxu0 0.0
  %105 = vmatpush2.msra.mxu0 0.0
  %106 = vmatprep.subr.mxu0 0.0
  %107 = vmatpush2.msra.mxu0 0.0
  %108 = vmatprep.subr.mxu0 0.0
  %109 = vmatpush2.msra.mxu0 0.0
  %110 = vmatprep.subr.mxu0 0.0
  %111 = vmatpush2.msra.mxu0 0.0
  %112 = vmatprep.mubr.f32.mxu0 0.0
  %113 = vmatmul.mubr.f32.gmra.mxu0 %v46
  %v114 = vpop.f32.mrf.mxu0
  %v115 = vadd.f32 0.0, %v114
  %v116 = vpop.f32.mrf.mxu0
  %117 = vdwg.mxu0
  %v118 = vadd.f32 %v41, %v115
  %119 = vst [vmem:[%s4] sm:$0xff] %v118
  // Predicated region
  $region22: #{global_average_block.1} parent=0 // pred_check
    %p120 = pneg %p17
  $region23: #{global_average_block.1} parent=0 // pred_check_branch
    %122 = sbr.rel (%p120) target = $region25
  $region24: #{global_average_block.1} parent=0 // pred_region
    %v123 = vld [vmem:[%s4] sm:$0xff]
    %v124 = vld [vmem:[%s2] sm:$0xff]
    %126 = vset.pattern.permute.xlu0 0
    %127 = vperm.xlu0 %126, %v124
    %v128 = vpop.permute.xlu0 %127
    %v130 = vmul.f32 %v123, %v128
    %131 = vst [vmem:[%s4] sm:$0xff] %v130
  $region25: #{global_average_block.1} parent=0 // pred_fallthru
    _
  // Predicated region
  $region26: #{global_average_block.1} parent=0 // pred_check
    _
  $region27: #{global_average_block.1} parent=0 // pred_check_branch
    %133 = sbr.rel (0) target = $region29
  $region28: #{global_average_block.1} parent=0 // pred_region
    _
  $region29: #{global_average_block.1} parent=0 // pred_fallthru
    _
  // Predicated region
  $region30: #{global_average_block.1} parent=0 // pred_check
    _
  $region31: #{global_average_block.1} parent=0 // pred_check_branch
    %135 = sbr.rel (0) target = $region33
  $region32: #{global_average_block.1} parent=0 // pred_region
    _
  $region33: #{global_average_block.1} parent=0 // pred_fallthru
    _

</llo_original>
